<compile_context>
chip_gen: v7x
topology: tpu7x:2x2x1
jax: 0.10.0
libtpu: 0.0.40
codegen_flags: <defaults>
</compile_context>

<pallas_src>
import functools

import jax
import jax.numpy as jnp
from jax import lax
from jax.experimental import pallas as pl
from jax.experimental.pallas import tpu as pltpu

_MIB = 1 << 20


def _code_to_feat_attn_kernel(code_ref, feat_ref, out_ref, *, inv_temp, one_hot):
    # code_ref: (bb, K, D), feat_ref: (bb, tn, D), out_ref: (bb, K, tn)
    c = code_ref[...]                       # streaming dtype straight to the MXU
    f = feat_ref[...]
    # einsum 'b k d, b n d -> b k n': batch over dim 0, contract the last dims.
    s = lax.dot_general(
        c, f,
        dimension_numbers=(((2,), (2,)), ((0,), (0,))),
        preferred_element_type=jnp.float32,
    )                                       # [bb, K, tn] f32 accumulator
    K = s.shape[1]

    if one_hot:
        # argmax over K is invariant to the positive temperature scaling and to
        # the softmax itself, so both are skipped. torch.argmax returns the
        # first maximal index on ties; replicate via the iota/min trick.
        m = jnp.max(s, axis=1, keepdims=True)                    # [bb, 1, tn]
        iota_k = lax.broadcasted_iota(jnp.int32, s.shape, 1)     # [bb, K, tn]
        cand = jnp.where(s == m, iota_k, K)
        idx = jnp.min(cand, axis=1, keepdims=True)               # [bb, 1, tn]
        out_ref[...] = (iota_k == idx).astype(out_ref.dtype)
    else:
        # numerically-stable softmax over K, temperature folded into exp arg.
        m = jnp.max(s, axis=1, keepdims=True)
        e = jnp.exp((s - m) * inv_temp)
        denom = jnp.sum(e, axis=1, keepdims=True)                # [bb, 1, tn]
        # Exact reciprocal of the reduced denominator (only bb*tn divides) so
        # the softmax normalizes exactly; the [K, tn] work stays a VPU multiply.
        inv = 1.0 / denom
        out_ref[...] = (e * inv).astype(out_ref.dtype)


def _vmem_cap_bytes():
    """Generation-aware VMEM request cap (leaves headroom for Mosaic scratch)."""
    phys = 128 * _MIB
    try:
        phys = int(pltpu.get_tpu_info().vmem_capacity_bytes)
    except Exception:
        pass
    if phys <= 64 * _MIB:          # v7x: 64 MiB physical per TensorCore
        return 46 * _MIB
    return 96 * _MIB               # v5e / v6e: 128 MiB physical


def _step_vmem_bytes(bb, K, D, tn, in_itemsize, out_itemsize):
    """Per-grid-step VMEM footprint: double-buffered tiles + f32 epilogue temps."""
    code_t = bb * K * D * in_itemsize
    feat_t = bb * tn * D * in_itemsize
    out_t = bb * K * tn * out_itemsize
    interm = 2 * bb * K * tn * 4          # s and e held in f32 in the epilogue
    return 2 * (code_t + feat_t + out_t) + interm


def _pick_block_b(B, K, N, D, in_itemsize, out_itemsize):
    """Pack batch elements only when the per-batch tiles are tiny, and keep
    >= 2 batch grid steps whenever B >= 2 so both v7x TensorCores get work."""
    b_cap = B // 2 if B >= 2 else 1
    per_b = _step_vmem_bytes(1, K, D, min(N, 512), in_itemsize, out_itemsize)
    for cand in range(max(1, b_cap), 0, -1):
        if B % cand == 0 and cand * per_b <= 2 * _MIB:
            return cand
    return 1


def _pick_block_n(N, K, D, bb, in_itemsize, out_itemsize, step_budget, need_split):
    """Largest legal N tile fitting the (double-buffered + f32-intermediate)
    budget. tn must be a multiple of 128 (lane-dense output last dim) or the
    full extent; 256-multiples preferred for the 2x256 MXU on v6e/v7x; feature
    tiles around 1-4 MiB are the measured HBM sweet spot."""
    feat_sweet = 4 * _MIB

    def fits(tn):
        return _step_vmem_bytes(bb, K, D, tn, in_itemsize, out_itemsize) <= step_budget

    divs = [d for d in range(128, N, 128) if N % d == 0]
    cands = sorted([d for d in divs if d % 256 == 0], reverse=True) + \
            sorted([d for d in divs if d % 256 != 0], reverse=True)
    if not need_split or not cands:
        cands = [N] + cands                  # full extent is always a legal block
    for tn in cands:                         # biggest tile inside the sweet spot
        if fits(tn) and bb * tn * D * in_itemsize <= feat_sweet:
            return tn
    for tn in cands:                         # otherwise biggest that fits at all
        if fits(tn):
            return tn
    return min(divs) if divs else N          # last resort


def code_to_feat_attn(code, features, *, dim=1, one_hot=False, temp=1.0,
                      block_b=None, block_n=None, stream_bf16=False):
    """Pallas implementation of CodeToFeatAttn.forward (dim=1, the module default).

    stream_bf16=True casts f32 operands to bf16 at the HBM boundary (~halves
    HBM traffic on this memory-bound kernel); accumulation and the softmax
    epilogue stay f32 and the output keeps the original dtype.  Accuracy
    tradeoff is the caller's choice.
    """
    # TODO(synk): only dim=1 (softmax over the code axis, the module default) is implemented.
    assert dim == 1, "kernel implements the module default dim=1 (softmax over K)"
    assert temp > 0
    B, K, D = code.shape
    Bf, N, Df = features.shape
    assert B == Bf and D == Df

    out_dtype = code.dtype
    if stream_bf16 and code.dtype == jnp.float32:
        code = code.astype(jnp.bfloat16)
        features = features.astype(jnp.bfloat16)

    in_itemsize = jnp.dtype(code.dtype).itemsize
    out_itemsize = jnp.dtype(out_dtype).itemsize

    vmem_cap = _vmem_cap_bytes()
    step_budget = min(int(0.5 * vmem_cap), 24 * _MIB)

    bb = block_b if block_b is not None else _pick_block_b(
        B, K, N, D, in_itemsize, out_itemsize)
    assert B % bb == 0

    n_orig = N
    if block_n is None:
        # An awkward (non multiple-of-128) N only stays a single full-extent
        # tile if that actually fits the budget; otherwise pad to a lane-dense
        # size so it can be tiled (padded columns are sliced off below).
        if N % 128 != 0 and _step_vmem_bytes(
                bb, K, D, N, in_itemsize, out_itemsize) > step_budget:
            pad = (-N) % 128
            features = jnp.pad(features, ((0, 0), (0, pad), (0, 0)))
            N = N + pad
        tn = _pick_block_n(N, K, D, bb, in_itemsize, out_itemsize,
                           step_budget, need_split=(B // bb) < 2)
    else:
        tn = block_n
    assert N % tn == 0

    kernel = functools.partial(
        _code_to_feat_attn_kernel,
        inv_temp=float(1.0 / temp),
        one_hot=bool(one_hot),
    )

    step_bytes = _step_vmem_bytes(bb, K, D, tn, in_itemsize, out_itemsize)
    vmem_limit = int(min(vmem_cap, max(32 * _MIB, 2 * step_bytes)))

    out = pl.pallas_call(
        kernel,
        out_shape=jax.ShapeDtypeStruct((B, K, N), out_dtype),
        grid_spec=pltpu.PrefetchScalarGridSpec(
            num_scalar_prefetch=0,
            grid=(B // bb, N // tn),
            in_specs=[
                # code tile stays resident across the inner N axis (no re-DMA)
                pl.BlockSpec((bb, K, D), lambda b, n: (b, 0, 0)),
                pl.BlockSpec((bb, tn, D), lambda b, n: (b, n, 0)),
            ],
            out_specs=pl.BlockSpec((bb, K, tn), lambda b, n: (b, 0, n)),
        ),
        compiler_params=pltpu.CompilerParams(
            dimension_semantics=("parallel", "parallel"),
            vmem_limit_bytes=vmem_limit,
        ),
    )(code, features)

    if N != n_orig:
        out = out[:, :, :n_orig]
    return out


def _reference(code, features, *, dim=1, one_hot=False, temp=1.0):
    attn = jnp.einsum("bkd,bnd->bkn", code, features,
                      precision=lax.Precision.HIGHEST,
                      preferred_element_type=jnp.float32)
    attn = jax.nn.softmax(attn / temp, axis=dim)
    if one_hot:
        idx = jnp.argmax(attn, axis=dim)                           # [B, N]
        oh = jax.nn.one_hot(idx, code.shape[1], dtype=code.dtype)  # [B, N, K]
        attn = jnp.transpose(oh, (0, 2, 1))                        # [B, K, N]
    return attn.astype(code.dtype)


if __name__ == "__main__":
    key = jax.random.PRNGKey(0)
    k1, k2, k3, k4, k5, k6 = jax.random.split(key, 6)

    # --- small shapes consistent with the module (K slots attend over N feats) ---
    B, K, N, D = 2, 8, 16, 32
    code = jax.random.normal(k1, (B, K, D), dtype=jnp.float32)
    features = jax.random.normal(k2, (B, N, D), dtype=jnp.float32)

    out = jax.block_until_ready(code_to_feat_attn(code, features))
    ref = _reference(code, features)
    assert out.shape == (B, K, N) and out.dtype == code.dtype
    assert jnp.allclose(out, ref, atol=2e-3, rtol=2e-3)
    # exact normalization in the epilogue -> softmax over K sums to 1
    assert jnp.allclose(jnp.sum(out, axis=1), 1.0, atol=2e-3)

    out_oh = jax.block_until_ready(code_to_feat_attn(code, features, one_hot=True))
    ref_oh = _reference(code, features, one_hot=True)
    assert jnp.array_equal(out_oh, ref_oh)

    # --- lane-dense shapes exercising the (batch, N)-tiled path (tn = 256-mult) ---
    B2, K2, N2, D2 = 2, 16, 256, 128
    code2 = jax.random.normal(k3, (B2, K2, D2), dtype=jnp.float32)
    feat2 = jax.random.normal(k4, (B2, N2, D2), dtype=jnp.float32)
    out2 = jax.block_until_ready(
        code_to_feat_attn(code2, feat2, temp=0.7, block_b=1, block_n=256))
    ref2 = _reference(code2, feat2, temp=0.7)
    assert out2.shape == (B2, K2, N2)
    assert jnp.allclose(out2, ref2, atol=2e-3, rtol=2e-3)

    # --- auto tiling with a single batch element: N splits so the grid has
    #     >= 2 parallel steps (keeps both v7x TensorCores busy) ---
    B3, K3, N3, D3 = 1, 8, 512, 128
    code3 = jax.random.normal(k5, (B3, K3, D3), dtype=jnp.float32)
    feat3 = jax.random.normal(k6, (B3, N3, D3), dtype=jnp.float32)
    out3 = jax.block_until_ready(code_to_feat_attn(code3, feat3))
    ref3 = _reference(code3, feat3)
    assert out3.shape == (B3, K3, N3)
    assert jnp.allclose(out3, ref3, atol=2e-3, rtol=2e-3)

    # --- bf16 streaming path (memory-bound win); smoke-check normalization ---
    out_bf = jax.block_until_ready(code_to_feat_attn(code2, feat2, stream_bf16=True))
    assert out_bf.shape == (B2, K2, N2) and out_bf.dtype == code2.dtype
    assert jnp.allclose(jnp.sum(out_bf, axis=1), 1.0, atol=2e-3)

    print("KERNEL_OK")
</pallas_src>

<mosaic_0001>
module attributes {stable_mosaic.version = 11 : i64} {
  func.func @_code_to_feat_attn_kernel(%arg0: i32, %arg1: i32, %arg2: memref<1x8x32xf32, #tpu.memory_space<vmem>>, %arg3: memref<1x16x32xf32, #tpu.memory_space<vmem>>, %arg4: memref<1x8x16xf32, #tpu.memory_space<vmem>>) attributes {dimension_semantics = [#tpu.dimension_semantics<parallel>, #tpu.dimension_semantics<parallel>], iteration_bounds = array<i64: 2, 1>, scalar_prefetch = 0 : i64, scratch_operands = 0 : i64, tpu.core_type = #tpu.core_type<tc>, window_params = [{transform_indices = @transform_0, window_bounds = array<i64: 1, 8, 32>}, {transform_indices = @transform_1, window_bounds = array<i64: 1, 16, 32>}, {transform_indices = @transform_2, window_bounds = array<i64: 1, 8, 16>}]} {
    %c0 = arith.constant 0 : index
    %c0_0 = arith.constant 0 : index
    %c0_1 = arith.constant 0 : index
    %0 = vector.load %arg2[%c0, %c0_0, %c0_1] : memref<1x8x32xf32, #tpu.memory_space<vmem>>, vector<1x8x32xf32>
    %c0_2 = arith.constant 0 : index
    %c0_3 = arith.constant 0 : index
    %c0_4 = arith.constant 0 : index
    %1 = vector.load %arg3[%c0_2, %c0_3, %c0_4] : memref<1x16x32xf32, #tpu.memory_space<vmem>>, vector<1x16x32xf32>
    %cst = arith.constant dense<0.000000e+00> : vector<1x8x16xf32>
    %2 = tpu.matmul %0, %1, %cst {dimension_numbers = #tpu.dot_dimension_numbers<[2], [2], [1], [1], [0, 0, 0, 1, 1, 1], [0], [0]>} : vector<1x8x32xf32>, vector<1x16x32xf32>, vector<1x8x16xf32> -> vector<1x8x16xf32>
    %cst_5 = arith.constant dense<0xFF800000> : vector<1x16xf32>
    %3 = vector.multi_reduction <maximumf>, %2, %cst_5 [1] : vector<1x8x16xf32> to vector<1x16xf32>
    %4 = vector.shape_cast %3 : vector<1x16xf32> to vector<1x1x16xf32>
    %5 = vector.broadcast %4 : vector<1x1x16xf32> to vector<1x8x16xf32>
    %6 = arith.subf %2, %5 : vector<1x8x16xf32>
    %cst_6 = arith.constant 1.000000e+00 : f32
    %7 = vector.broadcast %cst_6 : f32 to vector<1x8x16xf32>
    %8 = arith.mulf %6, %7 : vector<1x8x16xf32>
    %9 = math.exp %8 : vector<1x8x16xf32>
    %cst_7 = arith.constant dense<0.000000e+00> : vector<1x16xf32>
    %10 = vector.multi_reduction <add>, %9, %cst_7 [1] : vector<1x8x16xf32> to vector<1x16xf32>
    %11 = vector.shape_cast %10 : vector<1x16xf32> to vector<1x1x16xf32>
    %cst_8 = arith.constant 1.000000e+00 : f32
    %12 = vector.broadcast %cst_8 : f32 to vector<1x1x16xf32>
    %13 = arith.divf %12, %11 : vector<1x1x16xf32>
    %14 = vector.broadcast %13 : vector<1x1x16xf32> to vector<1x8x16xf32>
    %15 = arith.mulf %9, %14 : vector<1x8x16xf32>
    %c0_9 = arith.constant 0 : index
    %c0_10 = arith.constant 0 : index
    %c0_11 = arith.constant 0 : index
    %16 = vector.load %arg4[%c0_9, %c0_10, %c0_11] : memref<1x8x16xf32, #tpu.memory_space<vmem>>, vector<1x8x16xf32>
    tpu.vector_store %arg4[%c0_9, %c0_10, %c0_11], %15 {strides = array<i32>} : memref<1x8x16xf32, #tpu.memory_space<vmem>>, vector<1x8x16xf32>,
    return
  }
  func.func @transform_0(%arg0: i32, %arg1: i32) -> (i32, i32, i32) {
    %c0_i32 = arith.constant 0 : i32
    %c0_i32_0 = arith.constant 0 : i32
    %c0_i32_1 = arith.constant 0 : i32
    return %arg0, %c0_i32, %c0_i32_0 : i32, i32, i32
  }
  func.func @transform_1(%arg0: i32, %arg1: i32) -> (i32, i32, i32) {
    %c0_i32 = arith.constant 0 : i32
    %c0_i32_0 = arith.constant 0 : i32
    return %arg0, %arg1, %c0_i32 : i32, i32, i32
  }
  func.func @transform_2(%arg0: i32, %arg1: i32) -> (i32, i32, i32) {
    %c0_i32 = arith.constant 0 : i32
    %c0_i32_0 = arith.constant 0 : i32
    return %arg0, %c0_i32, %arg1 : i32, i32, i32
  }
}

</mosaic_0001>

<llo_original>
// kernel: tpu_custom_call.1
$region0: #{tpu_custom_call.1}
  #allocation0 [shape = 'u32[]', space=smem, size = 0x4, offset = 0x4, fixed_abs, tag = 'smem constant byte address 0x4 - core index']
  #allocation1 [shape = 'u32[144,128]{1,0:T(1,128)}', space=vmem, size = 0x12000, scoped, tag = 'internal scratch']
  %s0 = inlined_call_operand.hbm [shape: f32[2,8,32], index: 0, kind: input, shape index: {}]
  %s1 = inlined_call_operand.hbm [shape: f32[2,16,32], index: 1, kind: input, shape index: {}]
  %s2 = inlined_call_operand.hbm [shape: f32[2,8,16], index: 2, kind: output, shape index: {}]
  %s3 = sld [smem:[#allocation0]]
  $region49: #{tpu_custom_call.1} parent=0
    _
  %s5 = ssub.s32 1, %s3
  %s6 = scalar_select 0, %s5, %s3
  $region1: #{tpu_custom_call.1} parent=0
    #allocation2 [shape = 'u8[8192]{0}', space=vmem, size = 0x2000, scoped, tag = 'input window, operand 0']
    #allocation3 [shape = 's32[2]{0}', space=sflag, size = 0x8, scoped, tag = 'scoped memory for tpu_custom_call.1']
    #allocation4 [shape = 's32[2]{0}', space=sflag, size = 0x8, scoped, tag = 'scoped memory for tpu_custom_call.1']
    #allocation5 [shape = 'u8[16384]{0}', space=vmem, size = 0x4000, scoped, tag = 'input window, operand 1']
    #allocation6 [shape = 's32[2]{0}', space=sflag, size = 0x8, scoped, tag = 'scoped memory for tpu_custom_call.1']
    #allocation7 [shape = 'u8[8192]{0}', space=vmem, size = 0x2000, scoped, tag = 'output window, operand 0']
    %7 = vsyncpa [#allocation3], 0
    %s8 = scalar_lea.sflag [#allocation3], 1
    %9 = vsyncpa %s8, 0
    %10 = vsyncpa [#allocation6], 0
    %s11 = scalar_lea.sflag [#allocation6], 1
    %12 = vsyncpa %s11, 0
    %13 = vsyncpa [#allocation4], 0
    %s14 = scalar_lea.sflag [#allocation4], 1
    %15 = vsyncpa %s14, 0
    loop: start=0, step=1, limit=4
    $region2: #{tpu_custom_call.1} parent=1 // loop_pre_header
      _
    $region3: #{tpu_custom_call.1} parent=1 // loop_header
      %s17 = sphi 0, %s21
      %p18 = scmp.ge.s32.totalorder %s17, 4
      %s24 = sphi 0, %s36
      %s25 = sphi 0, %s32
      %s26 = sphi 0, %s24
      %s27 = sphi 0, %s25
      %s28 = sphi 0, %s26
      %s29 = sphi 0, %s27
      %s39 = sphi 0, %s41
      %s42 = sphi 0, %s39
      %s43 = sphi 0, %s42
      %s59 = sphi 0, %s43
      %s67 = sphi 0, %s69
      %s70 = sphi 0, %s67
      %s71 = sphi 0, %s70
      %s87 = sphi 0, %s71
      %s95 = sphi 0, %s97
      %s98 = sphi 0, %s95
      %s99 = sphi 0, %s98
      %s115 = sphi 0, %s99
    $region4: #{tpu_custom_call.1} parent=1 // loop_header_branch
      %20 = sbr.rel (%p18) target = $region8
    $region5: #{tpu_custom_call.1} parent=1 // loop_body
      %s22 = ssub.s32 %s17, 1
      %s23 = ssub.s32 %s17, 2
      %s30 = sadd.s32 1, %s25
      %p31 = scmp.ge.s32.totalorder %s30, 1
      %s32 = scalar_select %p31, 0, %s30
      %s33 = sadd.s32 1, %s24
      %s34 = scalar_select %p31, %s33, %s24
      %p35 = scmp.ge.s32.totalorder %s34, 2
      %s36 = scalar_select %p35, 0, %s34
      %s37 = ssub.s32 %s24, %s36
      %p38 = scmp.eq.s32.totalorder %s37, 0
      %s40 = sadd.s32 %s39, 1
      %s41 = scalar_select %p38, %s39, %s40
      %p44 = pneg %p38
      %p45 = scmp.eq.s32.totalorder %s17, 1
      %p46 = por %p44, %p45
      %p47 = scmp.ne.s32.totalorder %s39, %s42
      %p48 = scmp.eq.s32.totalorder %s17, 0
      %p49 = por %p47, %p48
      %p50 = scmp.ne.s32.totalorder %s39, %s42
      %p51 = scmp.eq.s32.totalorder %s22, 1
      %p52 = por %p50, %p51
      %p53 = scmp.ne.s32.totalorder %s42, %s43
      %p54 = scmp.eq.s32.totalorder %s22, 0
      %p55 = por %p53, %p54
      %p56 = scmp.ne.s32.totalorder %s42, %s43
      %p57 = scmp.eq.s32.totalorder %s23, 1
      %p58 = por %p56, %p57
      %p60 = scmp.ne.s32.totalorder %s43, %s59
      %p61 = scmp.eq.s32.totalorder %s23, 0
      %p62 = por %p60, %p61
      %s63 = ssub.s32 %s24, %s36
      %s64 = ssub.s32 %s25, %s32
      %s65 = sor.u32 %s63, %s64
      %p66 = scmp.eq.s32.totalorder %s65, 0
      %s68 = sadd.s32 %s67, 1
      %s69 = scalar_select %p66, %s67, %s68
      %p72 = pneg %p66
      %p73 = scmp.eq.s32.totalorder %s17, 1
      %p74 = por %p72, %p73
      %p75 = scmp.ne.s32.totalorder %s67, %s70
      %p76 = scmp.eq.s32.totalorder %s17, 0
      %p77 = por %p75, %p76
      %p78 = scmp.ne.s32.totalorder %s67, %s70
      %p79 = scmp.eq.s32.totalorder %s22, 1
      %p80 = por %p78, %p79
      %p81 = scmp.ne.s32.totalorder %s70, %s71
      %p82 = scmp.eq.s32.totalorder %s22, 0
      %p83 = por %p81, %p82
      %p84 = scmp.ne.s32.totalorder %s70, %s71
      %p85 = scmp.eq.s32.totalorder %s23, 1
      %p86 = por %p84, %p85
      %p88 = scmp.ne.s32.totalorder %s71, %s87
      %p89 = scmp.eq.s32.totalorder %s23, 0
      %p90 = por %p88, %p89
      %s91 = ssub.s32 %s24, %s36
      %s92 = ssub.s32 %s25, %s32
      %s93 = sor.u32 %s91, %s92
      %p94 = scmp.eq.s32.totalorder %s93, 0
      %s96 = sadd.s32 %s95, 1
      %s97 = scalar_select %p94, %s95, %s96
      %p100 = pneg %p94
      %p101 = scmp.eq.s32.totalorder %s17, 1
      %p102 = por %p100, %p101
      %p103 = scmp.ne.s32.totalorder %s95, %s98
      %p104 = scmp.eq.s32.totalorder %s17, 0
      %p105 = por %p103, %p104
      %p106 = scmp.ne.s32.totalorder %s95, %s98
      %p107 = scmp.eq.s32.totalorder %s22, 1
      %p108 = por %p106, %p107
      %p109 = scmp.ne.s32.totalorder %s98, %s99
      %p110 = scmp.eq.s32.totalorder %s22, 0
      %p111 = por %p109, %p110
      %p112 = scmp.ne.s32.totalorder %s98, %s99
      %p113 = scmp.eq.s32.totalorder %s23, 1
      %p114 = por %p112, %p113
      %p116 = scmp.ne.s32.totalorder %s99, %s115
      %p117 = scmp.eq.s32.totalorder %s23, 0
      %p118 = por %p116, %p117
      %p119 = scmp.le.s32.totalorder 1, %s17
      %p120 = scmp.lt.s32.totalorder %s17, 3
      %p121 = pnand %p119, %p120
      %p122 = pneg %p121
      // Predicated region
      $region9: #{tpu_custom_call.1} parent=5 // pred_check
        _
      $region10: #{tpu_custom_call.1} parent=5 // pred_check_branch
        %124 = sbr.rel (%p121) target = $region12
      $region11: #{tpu_custom_call.1} parent=5 // pred_region
        %s125 = ssub.s32 %s17, 1
      $region12: #{tpu_custom_call.1} parent=5 // pred_fallthru
        _
      %p126 = scmp.lt.s32.totalorder %s17, 2
      // Predicated region
      $region13: #{tpu_custom_call.1} parent=5 // pred_check
        %p127 = pneg %p126
      $region14: #{tpu_custom_call.1} parent=5 // pred_check_branch
        %129 = sbr.rel (%p127) target = $region16
      $region15: #{tpu_custom_call.1} parent=5 // pred_region
        // Predicated region
        $region17: #{tpu_custom_call.1} parent=15 // pred_check
          %p130 = pneg %p49
        $region18: #{tpu_custom_call.1} parent=15 // pred_check_branch
          %132 = sbr.rel (%p130) target = $region20
        $region19: #{tpu_custom_call.1} parent=15 // pred_region
          %s133 = sand.u32 %s39, 1
          %s134 = scalar_lea.sflag [#allocation3], %s133
          %s135 = sand.u32 %s39, 1
          %s136 = smul.addr %s135, 8
          %s137 = scalar_lea.vmem [#allocation2], %s136
          %s139 = ssub.s32 128, 128
          %140 = vsyncadd %s134, %s139
          %s141 = smul.addr %s24, 128
          %s142 = scalar_lea.hbm %s0, %s141
          %s144 = sshll.u32 %s137, 4
          %s145 = int_to_ptr.vmem [resolvable:$true] %s144
          %147 = dma.hbm_to_vmem [thread:$0]  %s142, 128, %s145, %s134
        $region20: #{tpu_custom_call.1} parent=15 // pred_fallthru
          _
        // Predicated region
        $region21: #{tpu_custom_call.1} parent=15 // pred_check
          %p148 = pneg %p77
        $region22: #{tpu_custom_call.1} parent=15 // pred_check_branch
          %150 = sbr.rel (%p148) target = $region24
        $region23: #{tpu_custom_call.1} parent=15 // pred_region
          %s151 = sand.u32 %s67, 1
          %s152 = scalar_lea.sflag [#allocation6], %s151
          %s153 = sand.u32 %s67, 1
          %s154 = smul.addr %s153, 16
          %s155 = scalar_lea.vmem [#allocation5], %s154
          %s156 = smul.u32 2, %s25
          %s158 = ssub.s32 256, 256
          %159 = vsyncadd %s152, %s158
          %s160 = smul.addr %s24, 2
          %s161 = sadd.s32 %s156, %s160
          %s162 = smul.addr %s161, 128
          %s163 = scalar_lea.hbm %s1, %s162
          %s164 = sshll.u32 %s155, 4
          %s165 = int_to_ptr.vmem [resolvable:$true] %s164
          %170 = dma.hbm_to_vmem [thread:$0]  %s163, 256, %s165, %s152, 128, 128, 8
        $region24: #{tpu_custom_call.1} parent=15 // pred_fallthru
          _
      $region16: #{tpu_custom_call.1} parent=5 // pred_fallthru
        _
      %p171 = scmp.le.s32.totalorder 1, %s17
      %p172 = scmp.lt.s32.totalorder %s17, 3
      %p173 = pnand %p171, %p172
      %p174 = pneg %p173
      // Predicated region
      $region25: #{tpu_custom_call.1} parent=5 // pred_check
        _
      $region26: #{tpu_custom_call.1} parent=5 // pred_check_branch
        %176 = sbr.rel (%p173) target = $region28
      $region27: #{tpu_custom_call.1} parent=5 // pred_region
        %s177 = ssub.s32 %s17, 1
        %s178 = sand.u32 %s42, 1
        %s179 = scalar_lea.sflag [#allocation3], %s178
        %s180 = sand.u32 %s42, 1
        %s181 = smul.addr %s180, 8
        %s182 = scalar_lea.vmem [#allocation2], %s181
        // Predicated region
        $region29: #{tpu_custom_call.1} parent=27 // pred_check
          %p183 = pneg %p55
        $region30: #{tpu_custom_call.1} parent=27 // pred_check_branch
          %185 = sbr.rel (%p183) target = $region32
        $region31: #{tpu_custom_call.1} parent=27 // pred_region
          %186 = dma.done %s179, 128
        $region32: #{tpu_custom_call.1} parent=27 // pred_fallthru
          _
        %s187 = sand.u32 %s70, 1
        %s188 = scalar_lea.sflag [#allocation6], %s187
        %s189 = sand.u32 %s70, 1
        %s190 = smul.addr %s189, 16
        %s191 = scalar_lea.vmem [#allocation5], %s190
        // Predicated region
        $region33: #{tpu_custom_call.1} parent=27 // pred_check
          %p192 = pneg %p83
        $region34: #{tpu_custom_call.1} parent=27 // pred_check_branch
          %194 = sbr.rel (%p192) target = $region36
        $region35: #{tpu_custom_call.1} parent=27 // pred_region
          %195 = dma.done %s188, 256
        $region36: #{tpu_custom_call.1} parent=27 // pred_fallthru
          _
        %s196 = sand.u32 %s42, 1
        %s197 = scalar_lea.sflag [#allocation3], %s196
        %s198 = sand.u32 %s42, 1
        %s199 = smul.addr %s198, 8
        %s200 = scalar_lea.vmem [#allocation2], %s199
        %p201 = pneg %p55
        %p202 = pneg %p52
        %s203 = sand.u32 %s70, 1
        %s204 = scalar_lea.sflag [#allocation6], %s203
        %s205 = sand.u32 %s70, 1
        %s206 = smul.addr %s205, 16
        %s207 = scalar_lea.vmem [#allocation5], %s206
        %p208 = pneg %p83
        %p209 = pneg %p80
        %p210 = pneg %p111
        %p211 = pneg %p108
        %s212 = sand.u32 %s98, 1
        %s213 = scalar_lea.sflag [#allocation4], %s212
        %s214 = sand.u32 %s98, 1
        %s215 = smul.addr %s214, 8
        %s216 = scalar_lea.vmem [#allocation7], %s215
        %s217 = smul.u32 2, %s27
        %v218 = vld [vmem:[%s182] sm:$0xff]
        %v219 = vld [vmem:[%s191] sm:$0xff]
        %v220 = vld [vmem:[%s191 + $0x8] sm:$0xff]
        %vm221 = vcmask 261120
        %v223 = vsel %vm221, %v218, 0
        %v226 = vsel %vm221, %v219, 0
        %v229 = vsel %vm221, %v220, 0
        %231 = vmatprep.subr.mxu0 0.0
        %232 = vmatpush1.xpose.msra.mxu0 %v226
        %233 = vmatprep.subr.mxu0 0.0
        %234 = vmatpush1.xpose.msra.mxu0 %v229
        %235 = vmatprep.subr.mxu0 0.0
        %236 = vmatpush1.xpose.msra.mxu0 0.0
        %237 = vmatprep.subr.mxu0 0.0
        %238 = vmatpush1.xpose.msra.mxu0 0.0
        %239 = vmatprep.subr.mxu0 0.0
        %240 = vmatpush1.xpose.msra.mxu0 0.0
        %241 = vmatprep.subr.mxu0 0.0
        %242 = vmatpush1.xpose.msra.mxu0 0.0
        %243 = vmatprep.subr.mxu0 0.0
        %244 = vmatpush1.xpose.msra.mxu0 0.0
        %245 = vmatprep.subr.mxu0 0.0
        %246 = vmatpush1.xpose.msra.mxu0 0.0
        %247 = vmatprep.subr.mxu0 0.0
        %248 = vmatpush1.xpose.msra.mxu0 0.0
        %249 = vmatprep.subr.mxu0 0.0
        %250 = vmatpush1.xpose.msra.mxu0 0.0
        %251 = vmatprep.subr.mxu0 0.0
        %252 = vmatpush1.xpose.msra.mxu0 0.0
        %253 = vmatprep.subr.mxu0 0.0
        %254 = vmatpush1.xpose.msra.mxu0 0.0
        %255 = vmatprep.subr.mxu0 0.0
        %256 = vmatpush1.xpose.msra.mxu0 0.0
        %257 = vmatprep.subr.mxu0 0.0
        %258 = vmatpush1.xpose.msra.mxu0 0.0
        %259 = vmatprep.subr.mxu0 0.0
        %260 = vmatpush1.xpose.msra.mxu0 0.0
        %261 = vmatprep.subr.mxu0 0.0
        %262 = vmatpush1.xpose.msra.mxu0 0.0
        %263 = vmatprep.subr.mxu0 0.0
        %264 = vmatpush1.xpose.msra.mxu0 0.0
        %265 = vmatprep.subr.mxu0 0.0
        %266 = vmatpush1.xpose.msra.mxu0 0.0
        %267 = vmatprep.subr.mxu0 0.0
        %268 = vmatpush1.xpose.msra.mxu0 0.0
        %269 = vmatprep.subr.mxu0 0.0
        %270 = vmatpush1.xpose.msra.mxu0 0.0
        %271 = vmatprep.subr.mxu0 0.0
        %272 = vmatpush1.xpose.msra.mxu0 0.0
        %273 = vmatprep.subr.mxu0 0.0
        %274 = vmatpush1.xpose.msra.mxu0 0.0
        %275 = vmatprep.subr.mxu0 0.0
        %276 = vmatpush1.xpose.msra.mxu0 0.0
        %277 = vmatprep.subr.mxu0 0.0
        %278 = vmatpush1.xpose.msra.mxu0 0.0
        %279 = vmatprep.subr.mxu0 0.0
        %280 = vmatpush1.xpose.msra.mxu0 0.0
        %281 = vmatprep.subr.mxu0 0.0
        %282 = vmatpush1.xpose.msra.mxu0 0.0
        %283 = vmatprep.subr.mxu0 0.0
        %284 = vmatpush1.xpose.msra.mxu0 0.0
        %285 = vmatprep.subr.mxu0 0.0
        %286 = vmatpush1.xpose.msra.mxu0 0.0
        %287 = vmatprep.subr.mxu0 0.0
        %288 = vmatpush1.xpose.msra.mxu0 0.0
        %289 = vmatprep.subr.mxu0 0.0
        %290 = vmatpush1.xpose.msra.mxu0 0.0
        %291 = vmatprep.subr.mxu0 0.0
        %292 = vmatpush1.xpose.msra.mxu0 0.0
        %293 = vmatprep.subr.mxu0 0.0
        %294 = vmatpush1.xpose.msra.mxu0 0.0
        %295 = vmatprep.mubr.f32.mxu0 0.0
        %296 = vmatmul.mubr.f32.gmra.mrb[0].mxu0 %v223
        %v297 = vpop.f32.mrb[0].mxu0
        %v298 = vadd.f32 0.0, %v297
        %v299 = vpop.f32.mrb[0].mxu0
        %300 = vdwg.mxu0
        %vm301 = vcmask 130048
        %v302 = vsel %vm301, %v298, -inf
        %v303 = vrot.slane %v302, 4
        %v304 = vmax.f32 %v302, %v303
        %v305 = vrot.slane %v304, 2
        %v306 = vmax.f32 %v304, %v305
        %v307 = vrot.slane %v306, 1
        %v308 = vmax.f32 %v306, %v307
        %v309 = vsub.f32 %v298, %v308
        %v310 = vmul.f32 %v309, 1.442695
        %v311 = vpow.pop %v310
        %v312 = vsel %vm301, %v311, 0.0
        %v313 = vrot.slane %v312, 4
        %v314 = vadd.f32 %v312, %v313
        %v315 = vrot.slane %v314, 2
        %v316 = vadd.f32 %v314, %v315
        %v317 = vrot.slane %v316, 1
        %v318 = vadd.f32 %v316, %v317
        %v319 = vrcp.pop %v318
        %v320 = vmul.f32 1.0, %v319
        %v321 = vmul.f32 %v311, %v320
        %322 = vst.msk [vmem:[%s216] sm:$0xff] %vm301, %v321
        %s323 = sand.u32 %s98, 1
        %s324 = scalar_lea.sflag [#allocation4], %s323
        %s325 = sand.u32 %s98, 1
        %s326 = smul.addr %s325, 8
        %s327 = scalar_lea.vmem [#allocation7], %s326
        // Predicated region
        $region37: #{tpu_custom_call.1} parent=27 // pred_check
          %p328 = pneg %p108
        $region38: #{tpu_custom_call.1} parent=27 // pred_check_branch
          %330 = sbr.rel (%p328) target = $region40
        $region39: #{tpu_custom_call.1} parent=27 // pred_region
          %s332 = ssub.s32 128, 128
          %333 = vsyncadd %s324, %s332
          %s334 = sadd.s32 %s27, %s26
          %s335 = smul.addr %s334, 128
          %s336 = scalar_lea.hbm %s2, %s335
          %s338 = sshll.u32 %s327, 4
          %s339 = int_to_ptr.vmem [resolvable:$true] %s338
          %341 = dma.vmem_to_hbm [thread:$0]  %s339, 128, %s336, %s324
        $region40: #{tpu_custom_call.1} parent=27 // pred_fallthru
          _
      $region28: #{tpu_custom_call.1} parent=5 // pred_fallthru
        _
      %p342 = scmp.le.s32.totalorder 2, %s17
      // Predicated region
      $region41: #{tpu_custom_call.1} parent=5 // pred_check
        %p343 = pneg %p342
      $region42: #{tpu_custom_call.1} parent=5 // pred_check_branch
        %345 = sbr.rel (%p343) target = $region44
      $region43: #{tpu_custom_call.1} parent=5 // pred_region
        %s346 = ssub.s32 %s17, 2
        // Predicated region
        $region45: #{tpu_custom_call.1} parent=43 // pred_check
          %p347 = pneg %p114
        $region46: #{tpu_custom_call.1} parent=43 // pred_check_branch
          %349 = sbr.rel (%p347) target = $region48
        $region47: #{tpu_custom_call.1} parent=43 // pred_region
          %s350 = sand.u32 %s99, 1
          %s351 = scalar_lea.sflag [#allocation4], %s350
          %s352 = sand.u32 %s99, 1
          %s353 = smul.addr %s352, 8
          %s354 = scalar_lea.vmem [#allocation7], %s353
          %355 = dma.done %s351, 128
        $region48: #{tpu_custom_call.1} parent=43 // pred_fallthru
          _
      $region44: #{tpu_custom_call.1} parent=5 // pred_fallthru
        _
    $region6: #{tpu_custom_call.1} parent=1 // loop_footer
      %s21 = sadd.s32 1, %s17
    $region7: #{tpu_custom_call.1} parent=1 // loop_footer_branch
      %16 = sbr.rel target = $region3
    $region8: #{tpu_custom_call.1} parent=1 // loop_exit
      _
    %356 = vsyncpa [#allocation3], 1
    %s357 = scalar_lea.sflag [#allocation3], 1
    %358 = vsyncpa %s357, 1
    %359 = vsyncpa [#allocation6], 1
    %s360 = scalar_lea.sflag [#allocation6], 1
    %361 = vsyncpa %s360, 1
    %362 = vsyncpa [#allocation4], 1
    %s363 = scalar_lea.sflag [#allocation4], 1
    %364 = vsyncpa %s363, 1

</llo_original>
